<compile_context>
chip_gen: v7x
topology: tpu7x:2x2x1
jax: 0.10.0
libtpu: 0.0.40
codegen_flags: <defaults>
</compile_context>

<pallas_src>
import functools

import jax
import jax.numpy as jnp
from jax.experimental import pallas as pl
from jax.experimental.pallas import tpu as pltpu


def _round_up(v, m):
    return (v + m - 1) // m * m


def _bf16_elemwise_ok():
    """bf16 VPU/EUP exists on v6e/v7x; keep f32 elementwise on older chips."""
    try:
        kind = jax.devices()[0].device_kind.lower()
    except Exception:
        return False
    return ("v6" in kind) or ("v7" in kind)


def _mlp_kernel(x_ref, w1_ref, b1_ref, w2_ref, b2_ref, o_ref, *, bf16_elemwise):
    # x_ref:(TM,K) bf16, w1_ref:(K,H) bf16, b1_ref:(1,H) f32,
    # w2_ref:(H,Np) bf16, b2_ref:(1,Np) f32, o_ref:(TM,Np) f32
    h = jnp.dot(x_ref[...], w1_ref[...], preferred_element_type=jnp.float32)
    if bf16_elemwise:
        # v6e/v7x: bf16 VPU + bf16 EUP tanh; also skips the extra f32->bf16 pack.
        h = jnp.tanh(h.astype(jnp.bfloat16) + b1_ref[...].astype(jnp.bfloat16))
    else:
        # v5e: no bf16 VPU/EUP -> stay in f32 for the elementwise/tanh stage.
        h = jnp.tanh(h + b1_ref[...]).astype(jnp.bfloat16)
    out = jnp.dot(h, w2_ref[...], preferred_element_type=jnp.float32)
    o_ref[...] = (out + b2_ref[...]).astype(o_ref.dtype)


def prepare_params(w1, b1, w2, b2):
    """One-time pad + cast of the weights/biases (hoisted out of the forward)."""
    K, H = w1.shape
    N = w2.shape[1]
    N_pad = _round_up(N, 128)

    w1_p = w1.astype(jnp.bfloat16)                     # (K, H), K unpadded
    b1_p = b1.reshape(1, H).astype(jnp.float32)
    w2_p = jnp.zeros((H, N_pad), jnp.bfloat16).at[:, :N].set(
        w2.astype(jnp.bfloat16))
    b2_p = jnp.zeros((1, N_pad), jnp.float32).at[0, :N].set(
        b2.astype(jnp.float32))
    return (w1_p, b1_p, w2_p, b2_p), N


def model_forward(x, params, n_out, *, tm=256):
    """x:[B,K] f32, params from prepare_params -> [B, n_out] f32."""
    w1_p, b1_p, w2_p, b2_p = params
    B, K = x.shape
    H = w1_p.shape[1]
    N_pad = w2_p.shape[1]

    bf16_elemwise = _bf16_elemwise_ok()
    kernel = functools.partial(_mlp_kernel, bf16_elemwise=bf16_elemwise)

    x_b = x.astype(jnp.bfloat16)

    if B <= tm:
        # Small batch: pad only to the bf16 sublane multiple (16) and run a
        # gridless, single-invocation kernel (no pipelining bookkeeping).
        B_pad = max(16, _round_up(B, 16))
        if B_pad != B:
            x_b = jnp.zeros((B_pad, K), jnp.bfloat16).at[:B].set(x_b)

        out_p = pl.pallas_call(
            kernel,
            out_shape=jax.ShapeDtypeStruct((B_pad, N_pad), jnp.float32),
            in_specs=[pl.BlockSpec(memory_space=pltpu.MemorySpace.VMEM)] * 5,
            out_specs=pl.BlockSpec(memory_space=pltpu.MemorySpace.VMEM),
        )(x_b, w1_p, b1_p, w2_p, b2_p)
    else:
        # Large batch: tile the batch with a grid; weights/biases keep constant
        # index_maps (VMEM-resident), batch axis is "parallel" so v7x can shard
        # it across both TensorCores.
        B_pad = _round_up(B, tm)
        if B_pad != B:
            x_b = jnp.zeros((B_pad, K), jnp.bfloat16).at[:B].set(x_b)

        out_p = pl.pallas_call(
            kernel,
            out_shape=jax.ShapeDtypeStruct((B_pad, N_pad), jnp.float32),
            grid=(B_pad // tm,),
            in_specs=[
                pl.BlockSpec((tm, K), lambda i: (i, 0)),      # x: batch-tiled
                pl.BlockSpec((K, H), lambda i: (0, 0)),       # weights resident
                pl.BlockSpec((1, H), lambda i: (0, 0)),
                pl.BlockSpec((H, N_pad), lambda i: (0, 0)),
                pl.BlockSpec((1, N_pad), lambda i: (0, 0)),
            ],
            out_specs=pl.BlockSpec((tm, N_pad), lambda i: (i, 0)),
            compiler_params=pltpu.CompilerParams(
                dimension_semantics=("parallel",),
                vmem_limit_bytes=64 << 20,
            ),
        )(x_b, w1_p, b1_p, w2_p, b2_p)

    return out_p[:B, :n_out]


def init_params(key, in_features, nn_hidden, num_labels):
    k1, k2 = jax.random.split(key)
    # NaiveLinear: weight ~ U(-1, 1), bias = 0
    w1 = jax.random.uniform(k1, (in_features, nn_hidden),
                            minval=-1.0, maxval=1.0, dtype=jnp.float32)
    b1 = jnp.zeros((nn_hidden,), jnp.float32)
    w2 = jax.random.uniform(k2, (nn_hidden, num_labels),
                            minval=-1.0, maxval=1.0, dtype=jnp.float32)
    b2 = jnp.zeros((num_labels,), jnp.float32)
    return w1, b1, w2, b2


if __name__ == "__main__":
    key = jax.random.PRNGKey(0)
    kx, kp = jax.random.split(key)

    batch = 8
    in_features = 64
    nn_hidden = 512      # matches the module's nn_hidden
    num_labels = 10

    x = jax.random.normal(kx, (batch, in_features), dtype=jnp.float32)
    w1, b1, w2, b2 = init_params(kp, in_features, nn_hidden, num_labels)

    # Weight pad/cast once (reused across forward calls).
    params, n_out = prepare_params(w1, b1, w2, b2)

    out = model_forward(x, params, n_out)
    jax.block_until_ready(out)
    assert out.shape == (batch, num_labels)

    # Reference mirroring the kernel's math path (bf16 matmul operands,
    # f32 accumulation; elementwise dtype matches the chip-dependent choice).
    # NOTE: bf16 operands mean ~1e-2-level divergence from a pure-f32 PyTorch
    # reference is expected and in-spec here.
    bf16_elemwise = _bf16_elemwise_ok()
    xb = x.astype(jnp.bfloat16)
    w1b = w1.astype(jnp.bfloat16)
    w2b = w2.astype(jnp.bfloat16)
    h_ref = jnp.dot(xb, w1b, preferred_element_type=jnp.float32)
    if bf16_elemwise:
        h_ref = jnp.tanh(h_ref.astype(jnp.bfloat16) + b1.astype(jnp.bfloat16))
    else:
        h_ref = jnp.tanh(h_ref + b1).astype(jnp.bfloat16)
    ref = jnp.dot(h_ref, w2b, preferred_element_type=jnp.float32) + b2
    assert jnp.allclose(out, ref, atol=5e-2, rtol=5e-2), (
        jnp.max(jnp.abs(out - ref)))

    print("KERNEL_OK")
</pallas_src>

<mosaic_0001>
module attributes {stable_mosaic.version = 11 : i64} {
  func.func @_mlp_kernel(%arg0: memref<16x64xbf16, #tpu.memory_space<vmem>>, %arg1: memref<64x512xbf16, #tpu.memory_space<vmem>>, %arg2: memref<1x512xf32, #tpu.memory_space<vmem>>, %arg3: memref<512x128xbf16, #tpu.memory_space<vmem>>, %arg4: memref<1x128xf32, #tpu.memory_space<vmem>>, %arg5: memref<16x128xf32, #tpu.memory_space<vmem>>) attributes {dimension_semantics = [], scalar_prefetch = 0 : i64, scratch_operands = 0 : i64, tpu.core_type = #tpu.core_type<tc>} {
    %c0 = arith.constant 0 : index
    %c0_0 = arith.constant 0 : index
    %0 = vector.load %arg0[%c0, %c0_0] : memref<16x64xbf16, #tpu.memory_space<vmem>>, vector<16x64xbf16>
    %c0_1 = arith.constant 0 : index
    %c0_2 = arith.constant 0 : index
    %1 = vector.load %arg1[%c0_1, %c0_2] : memref<64x512xbf16, #tpu.memory_space<vmem>>, vector<64x512xbf16>
    %cst = arith.constant dense<0.000000e+00> : vector<16x512xf32>
    %2 = tpu.matmul %0, %1, %cst {dimension_numbers = #tpu.dot_dimension_numbers<[1], [0], [0], [1], [0, 0, 1, 1], [], []>} : vector<16x64xbf16>, vector<64x512xbf16>, vector<16x512xf32> -> vector<16x512xf32>
    %c0_3 = arith.constant 0 : index
    %c0_4 = arith.constant 0 : index
    %3 = vector.load %arg2[%c0_3, %c0_4] : memref<1x512xf32, #tpu.memory_space<vmem>>, vector<1x512xf32>
    %4 = vector.broadcast %3 : vector<1x512xf32> to vector<16x512xf32>
    %5 = arith.addf %2, %4 : vector<16x512xf32>
    %6 = math.tanh %5 : vector<16x512xf32>
    %7 = arith.truncf %6 : vector<16x512xf32> to vector<16x512xbf16>
    %c0_5 = arith.constant 0 : index
    %c0_6 = arith.constant 0 : index
    %8 = vector.load %arg3[%c0_5, %c0_6] : memref<512x128xbf16, #tpu.memory_space<vmem>>, vector<512x128xbf16>
    %cst_7 = arith.constant dense<0.000000e+00> : vector<16x128xf32>
    %9 = tpu.matmul %7, %8, %cst_7 {dimension_numbers = #tpu.dot_dimension_numbers<[1], [0], [0], [1], [0, 0, 1, 1], [], []>} : vector<16x512xbf16>, vector<512x128xbf16>, vector<16x128xf32> -> vector<16x128xf32>
    %c0_8 = arith.constant 0 : index
    %c0_9 = arith.constant 0 : index
    %10 = vector.load %arg4[%c0_8, %c0_9] : memref<1x128xf32, #tpu.memory_space<vmem>>, vector<1x128xf32>
    %11 = vector.broadcast %10 : vector<1x128xf32> to vector<16x128xf32>
    %12 = arith.addf %9, %11 : vector<16x128xf32>
    %c0_10 = arith.constant 0 : index
    %c0_11 = arith.constant 0 : index
    %13 = vector.load %arg5[%c0_10, %c0_11] : memref<16x128xf32, #tpu.memory_space<vmem>>, vector<16x128xf32>
    tpu.vector_store %arg5[%c0_10, %c0_11], %12 {strides = array<i32>} : memref<16x128xf32, #tpu.memory_space<vmem>>, vector<16x128xf32>,
    return
  }
}

</mosaic_0001>

<llo_original>
// kernel: tpu_custom_call.1
$region0: #{tpu_custom_call.1}
  #allocation0 [shape = 'u32[]', space=smem, size = 0x4, offset = 0x4, fixed_abs, tag = 'smem constant byte address 0x4 - core index']
  #allocation1 [shape = 'u32[144,128]{1,0:T(1,128)}', space=vmem, size = 0x12000, scoped, tag = 'internal scratch']
  %s0 = inlined_call_operand.hbm [shape: bf16[16,64], index: 0, kind: input, shape index: {}]
  %s1 = inlined_call_operand.hbm [shape: bf16[64,512], index: 1, kind: input, shape index: {}]
  %s2 = inlined_call_operand.vmem [shape: f32[1,512], index: 2, kind: input, shape index: {}]
  %s3 = inlined_call_operand.hbm [shape: bf16[512,128], index: 3, kind: input, shape index: {}]
  %s4 = inlined_call_operand.vmem [shape: f32[1,128], index: 4, kind: input, shape index: {}]
  %s5 = inlined_call_operand.hbm [shape: f32[16,128], index: 5, kind: output, shape index: {}]
  %s6 = sld [smem:[#allocation0]]
  $region42: #{tpu_custom_call.1} parent=0
    _
  %s8 = ssub.s32 1, %s6
  %s9 = scalar_select 0, %s8, %s6
  $region1: #{tpu_custom_call.1} parent=0
    #allocation2 [shape = 'u8[4096]{0}', space=vmem, size = 0x1000, scoped, tag = 'input window, operand 0, single buffered']
    #allocation3 [shape = 's32[1]{0}', space=sflag, size = 0x4, scoped, tag = 'scoped memory for tpu_custom_call.1']
    #allocation4 [shape = 's32[1]{0}', space=sflag, size = 0x4, scoped, tag = 'scoped memory for tpu_custom_call.1']
    #allocation5 [shape = 'u8[65536]{0}', space=vmem, size = 0x10000, scoped, tag = 'input window, operand 1, single buffered']
    #allocation6 [shape = 's32[1]{0}', space=sflag, size = 0x4, scoped, tag = 'scoped memory for tpu_custom_call.1']
    #allocation7 [shape = 'u8[131072]{0}', space=vmem, size = 0x20000, scoped, tag = 'input window, operand 3, single buffered']
    #allocation8 [shape = 'u8[8192]{0}', space=vmem, size = 0x2000, scoped, tag = 'output window, operand 0, single buffered']
    %10 = vsyncpa [#allocation3], 0
    %11 = vsyncpa [#allocation6], 0
    %12 = vsyncpa [#allocation4], 0
    // Predicated region
    $region2: #{tpu_custom_call.1} parent=1 // pred_check
      _
    $region3: #{tpu_custom_call.1} parent=1 // pred_check_branch
      %14 = sbr.rel (0) target = $region5
    $region4: #{tpu_custom_call.1} parent=1 // pred_region
      %s16 = ssub.s32 128, 128
      %17 = vsyncadd [#allocation3], %s16
      %s18 = sshll.u32 [#allocation2], 4
      %s19 = int_to_ptr.vmem [resolvable:$true] %s18
      %24 = dma.hbm_to_vmem [thread:$0]  %s0, 128, %s19, [#allocation3], 64, 64, 4
    $region5: #{tpu_custom_call.1} parent=1 // pred_fallthru
      _
    // Predicated region
    $region6: #{tpu_custom_call.1} parent=1 // pred_check
      _
    $region7: #{tpu_custom_call.1} parent=1 // pred_check_branch
      %26 = sbr.rel (0) target = $region9
    $region8: #{tpu_custom_call.1} parent=1 // pred_region
      %s28 = ssub.s32 2048, 2048
      %29 = vsyncadd [#allocation6], %s28
      %s30 = sshll.u32 [#allocation5], 4
      %s31 = int_to_ptr.vmem [resolvable:$true] %s30
      %36 = dma.hbm_to_vmem [thread:$0]  %s1, 2048, %s31, [#allocation6], 256, 256, 16
    $region9: #{tpu_custom_call.1} parent=1 // pred_fallthru
      _
    // Predicated region
    $region10: #{tpu_custom_call.1} parent=1 // pred_check
      _
    $region11: #{tpu_custom_call.1} parent=1 // pred_check_branch
      %38 = sbr.rel (0) target = $region13
    $region12: #{tpu_custom_call.1} parent=1 // pred_region
      _
    $region13: #{tpu_custom_call.1} parent=1 // pred_fallthru
      _
    // Predicated region
    $region14: #{tpu_custom_call.1} parent=1 // pred_check
      _
    $region15: #{tpu_custom_call.1} parent=1 // pred_check_branch
      %40 = sbr.rel (0) target = $region17
    $region16: #{tpu_custom_call.1} parent=1 // pred_region
      %s42 = ssub.s32 4096, 4096
      %43 = vsyncadd [#allocation6], %s42
      %s44 = sshll.u32 [#allocation7], 4
      %s45 = int_to_ptr.vmem [resolvable:$true] %s44
      %50 = dma.hbm_to_vmem [thread:$0]  %s3, 4096, %s45, [#allocation6], 64, 64, 4
    $region17: #{tpu_custom_call.1} parent=1 // pred_fallthru
      _
    // Predicated region
    $region18: #{tpu_custom_call.1} parent=1 // pred_check
      _
    $region19: #{tpu_custom_call.1} parent=1 // pred_check_branch
      %52 = sbr.rel (0) target = $region21
    $region20: #{tpu_custom_call.1} parent=1 // pred_region
      _
    $region21: #{tpu_custom_call.1} parent=1 // pred_fallthru
      _
    // Predicated region
    $region22: #{tpu_custom_call.1} parent=1 // pred_check
      _
    $region23: #{tpu_custom_call.1} parent=1 // pred_check_branch
      %54 = sbr.rel (0) target = $region25
    $region24: #{tpu_custom_call.1} parent=1 // pred_region
      %55 = dma.done [#allocation3], 128
    $region25: #{tpu_custom_call.1} parent=1 // pred_fallthru
      _
    // Predicated region
    $region26: #{tpu_custom_call.1} parent=1 // pred_check
      _
    $region27: #{tpu_custom_call.1} parent=1 // pred_check_branch
      %57 = sbr.rel (0) target = $region29
    $region28: #{tpu_custom_call.1} parent=1 // pred_region
      %58 = dma.done [#allocation6], 2048
    $region29: #{tpu_custom_call.1} parent=1 // pred_fallthru
      _
    // Predicated region
    $region30: #{tpu_custom_call.1} parent=1 // pred_check
      _
    $region31: #{tpu_custom_call.1} parent=1 // pred_check_branch
      %60 = sbr.rel (0) target = $region33
    $region32: #{tpu_custom_call.1} parent=1 // pred_region
      %61 = dma.done [#allocation6], 4096
    $region33: #{tpu_custom_call.1} parent=1 // pred_fallthru
      _
    %v63 = vld [vmem:[#allocation2] sm:$0xf]
    %v64 = vld [vmem:[#allocation2 + $0x4] sm:$0xf]
    %v65 = vld [vmem:[#allocation5] sm:$0xff]
    %v66 = vld [vmem:[#allocation5 + $0x8] sm:$0xff]
    %v67 = vld [vmem:[#allocation5 + $0x10] sm:$0xff]
    %v68 = vld [vmem:[#allocation5 + $0x18] sm:$0xff]
    %v69 = vld [vmem:[#allocation5 + $0x20] sm:$0xff]
    %v70 = vld [vmem:[#allocation5 + $0x28] sm:$0xff]
    %v71 = vld [vmem:[#allocation5 + $0x30] sm:$0xff]
    %v72 = vld [vmem:[#allocation5 + $0x38] sm:$0xff]
    %v73 = vld [vmem:[#allocation5 + $0x40] sm:$0xff]
    %v74 = vld [vmem:[#allocation5 + $0x48] sm:$0xff]
    %v75 = vld [vmem:[#allocation5 + $0x50] sm:$0xff]
    %v76 = vld [vmem:[#allocation5 + $0x58] sm:$0xff]
    %v77 = vld [vmem:[#allocation5 + $0x60] sm:$0xff]
    %v78 = vld [vmem:[#allocation5 + $0x68] sm:$0xff]
    %v79 = vld [vmem:[#allocation5 + $0x70] sm:$0xff]
    %v80 = vld [vmem:[#allocation5 + $0x78] sm:$0xff]
    %v81 = vld [vmem:[%s2] sm:$0xf]
    %v83 = vlaneseq
    %v84 = vshrl.u32 %v83, 7
    %v85 = vsub.s32 0, %v84
    %v86 = vrot.slane %v81, %v85
    %v87 = vlaneseq
    %v88 = vshrl.u32 %v87, 7
    %v89 = vsub.s32 1, %v88
    %v90 = vrot.slane %v81, %v89
    %v91 = vlaneseq
    %v92 = vshrl.u32 %v91, 7
    %v93 = vsub.s32 2, %v92
    %v94 = vrot.slane %v81, %v93
    %v95 = vlaneseq
    %v96 = vshrl.u32 %v95, 7
    %v97 = vsub.s32 3, %v96
    %v98 = vrot.slane %v81, %v97
    %v105 = vunpack.c.l.b16 %v63
    %v106 = vunpack.c.l.b16 %v64
    %v107 = vpack.c.b16 %v106, %v105
    %v124 = vunpack.c.l.b16 %v65
    %v125 = vunpack.c.h.b16 %v65
    %v126 = vunpack.c.l.b16 %v66
    %v127 = vunpack.c.h.b16 %v66
    %v128 = vunpack.c.l.b16 %v67
    %v129 = vunpack.c.h.b16 %v67
    %v130 = vunpack.c.l.b16 %v68
    %v131 = vunpack.c.h.b16 %v68
    %v132 = vunpack.c.l.b16 %v69
    %v133 = vunpack.c.h.b16 %v69
    %v134 = vunpack.c.l.b16 %v70
    %v135 = vunpack.c.h.b16 %v70
    %v136 = vunpack.c.l.b16 %v71
    %v137 = vunpack.c.h.b16 %v71
    %v138 = vunpack.c.l.b16 %v72
    %v139 = vunpack.c.h.b16 %v72
    %v140 = vunpack.c.l.b16 %v73
    %v141 = vunpack.c.h.b16 %v73
    %v142 = vunpack.c.l.b16 %v74
    %v143 = vunpack.c.h.b16 %v74
    %v144 = vunpack.c.l.b16 %v75
    %v145 = vunpack.c.h.b16 %v75
    %v146 = vunpack.c.l.b16 %v76
    %v147 = vunpack.c.h.b16 %v76
    %v148 = vunpack.c.l.b16 %v77
    %v149 = vunpack.c.h.b16 %v77
    %v150 = vunpack.c.l.b16 %v78
    %v151 = vunpack.c.h.b16 %v78
    %v152 = vunpack.c.l.b16 %v79
    %v153 = vunpack.c.h.b16 %v79
    %v154 = vunpack.c.l.b16 %v80
    %v155 = vunpack.c.h.b16 %v80
    %v156 = vpack.c.b16 %v128, %v124
    %v157 = vpack.c.b16 %v129, %v125
    %v158 = vpack.c.b16 %v130, %v126
    %v159 = vpack.c.b16 %v131, %v127
    %v160 = vpack.c.b16 %v136, %v132
    %v161 = vpack.c.b16 %v137, %v133
    %v162 = vpack.c.b16 %v138, %v134
    %v163 = vpack.c.b16 %v139, %v135
    %v164 = vpack.c.b16 %v144, %v140
    %v165 = vpack.c.b16 %v145, %v141
    %v166 = vpack.c.b16 %v146, %v142
    %v167 = vpack.c.b16 %v147, %v143
    %v168 = vpack.c.b16 %v152, %v148
    %v169 = vpack.c.b16 %v153, %v149
    %v170 = vpack.c.b16 %v154, %v150
    %v171 = vpack.c.b16 %v155, %v151
    %vm188 = vcmask 523264
    %v190 = vsel %vm188, %v107, 0
    %192 = vmatprep.subr.bf16.mxu0 %v157
    %193 = vmatpush1.bf16.msra.mxu0 %v156
    %194 = vmatprep.subr.bf16.mxu0 %v161
    %195 = vmatpush1.bf16.msra.mxu0 %v160
    %196 = vmatprep.subr.bf16.mxu0 %v165
    %197 = vmatpush1.bf16.msra.mxu0 %v164
    %198 = vmatprep.subr.bf16.mxu0 %v169
    %199 = vmatpush1.bf16.msra.mxu0 %v168
    %200 = vmatprep.subr.bf16.mxu0 0
    %201 = vmatpush1.bf16.msra.mxu0 0
    %202 = vmatprep.subr.bf16.mxu0 0
    %203 = vmatpush1.bf16.msra.mxu0 0
    %204 = vmatprep.subr.bf16.mxu0 0
    %205 = vmatpush1.bf16.msra.mxu0 0
    %206 = vmatprep.subr.bf16.mxu0 0
    %207 = vmatpush1.bf16.msra.mxu0 0
    %208 = vmatprep.subr.bf16.mxu0 0
    %209 = vmatpush1.bf16.msra.mxu0 0
    %210 = vmatprep.subr.bf16.mxu0 0
    %211 = vmatpush1.bf16.msra.mxu0 0
    %212 = vmatprep.subr.bf16.mxu0 0
    %213 = vmatpush1.bf16.msra.mxu0 0
    %214 = vmatprep.subr.bf16.mxu0 0
    %215 = vmatpush1.bf16.msra.mxu0 0
    %216 = vmatprep.subr.bf16.mxu0 0
    %217 = vmatpush1.bf16.msra.mxu0 0
    %218 = vmatprep.subr.bf16.mxu0 0
    %219 = vmatpush1.bf16.msra.mxu0 0
    %220 = vmatprep.subr.bf16.mxu0 0
    %221 = vmatpush1.bf16.msra.mxu0 0
    %222 = vmatprep.subr.bf16.mxu0 0
    %223 = vmatpush1.bf16.msra.mxu0 0
    %224 = vmatprep.mubr.bf16.mxu0 0
    %225 = vmatmul.mubr.bf16.gmra.mrb[0].mxu0 %v190
    %v226 = vpop.f32.mrb[0].mxu0
    %v227 = vadd.f32 %v86, %v226
    %v228 = vpop.f32.mrb[0].mxu0
    %v229 = vadd.f32 %v90, %v228
    %v230 = vpop.f32.mrb[0].mxu0
    %v231 = vadd.f32 %v86, %v230
    %v232 = vpop.f32.mrb[0].mxu0
    %v233 = vadd.f32 %v90, %v232
    %234 = vdwg.mxu0
    %235 = vmatprep.subr.bf16.mxu0 %v159
    %236 = vmatpush1.bf16.msra.mxu0 %v158
    %237 = vmatprep.subr.bf16.mxu0 %v163
    %238 = vmatpush1.bf16.msra.mxu0 %v162
    %239 = vmatprep.subr.bf16.mxu0 %v167
    %240 = vmatpush1.bf16.msra.mxu0 %v166
    %241 = vmatprep.subr.bf16.mxu0 %v171
    %242 = vmatpush1.bf16.msra.mxu0 %v170
    %243 = vmatprep.subr.bf16.mxu0 0
    %244 = vmatpush1.bf16.msra.mxu0 0
    %245 = vmatprep.subr.bf16.mxu0 0
    %246 = vmatpush1.bf16.msra.mxu0 0
    %247 = vmatprep.subr.bf16.mxu0 0
    %248 = vmatpush1.bf16.msra.mxu0 0
    %249 = vmatprep.subr.bf16.mxu0 0
    %250 = vmatpush1.bf16.msra.mxu0 0
    %251 = vmatprep.subr.bf16.mxu0 0
    %252 = vmatpush1.bf16.msra.mxu0 0
    %253 = vmatprep.subr.bf16.mxu0 0
    %254 = vmatpush1.bf16.msra.mxu0 0
    %255 = vmatprep.subr.bf16.mxu0 0
    %256 = vmatpush1.bf16.msra.mxu0 0
    %257 = vmatprep.subr.bf16.mxu0 0
    %258 = vmatpush1.bf16.msra.mxu0 0
    %259 = vmatprep.subr.bf16.mxu0 0
    %260 = vmatpush1.bf16.msra.mxu0 0
    %261 = vmatprep.subr.bf16.mxu0 0
    %262 = vmatpush1.bf16.msra.mxu0 0
    %263 = vmatprep.subr.bf16.mxu0 0
    %264 = vmatpush1.bf16.msra.mxu0 0
    %265 = vmatprep.subr.bf16.mxu0 0
    %266 = vmatpush1.bf16.msra.mxu0 0
    %267 = vmatprep.mubr.bf16.mxu0 0
    %268 = vmatmul.mubr.bf16.gmra.mrb[0].mxu0 %v190
    %v269 = vpop.f32.mrb[0].mxu0
    %v270 = vadd.f32 %v94, %v269
    %v271 = vpop.f32.mrb[0].mxu0
    %v272 = vadd.f32 %v98, %v271
    %v273 = vpop.f32.mrb[0].mxu0
    %v274 = vadd.f32 %v94, %v273
    %v275 = vpop.f32.mrb[0].mxu0
    %v276 = vadd.f32 %v98, %v275
    %277 = vdwg.mxu0
    %v278 = vtanh.pop %v227
    %v279 = vtanh.pop %v229
    %v280 = vtanh.pop %v270
    %v281 = vtanh.pop %v272
    %v282 = vtanh.pop %v231
    %v283 = vtanh.pop %v233
    %v284 = vtanh.pop %v274
    %v285 = vtanh.pop %v276
    %v286 = vpack.c.bf16 %v282, %v278
    %v287 = vpack.c.bf16 %v283, %v279
    %v288 = vpack.c.bf16 %v284, %v280
    %v289 = vpack.c.bf16 %v285, %v281
    %v290 = vld [vmem:[#allocation7] sm:$0xf]
    %v291 = vld [vmem:[#allocation7 + $0x4] sm:$0xf]
    %v292 = vld [vmem:[#allocation7 + $0x8] sm:$0xf]
    %v293 = vld [vmem:[#allocation7 + $0xc] sm:$0xf]
    %v294 = vld [vmem:[#allocation7 + $0x10] sm:$0xf]
    %v295 = vld [vmem:[#allocation7 + $0x14] sm:$0xf]
    %v296 = vld [vmem:[#allocation7 + $0x18] sm:$0xf]
    %v297 = vld [vmem:[#allocation7 + $0x1c] sm:$0xf]
    %v298 = vld [vmem:[#allocation7 + $0x20] sm:$0xf]
    %v299 = vld [vmem:[#allocation7 + $0x24] sm:$0xf]
    %v300 = vld [vmem:[#allocation7 + $0x28] sm:$0xf]
    %v301 = vld [vmem:[#allocation7 + $0x2c] sm:$0xf]
    %v302 = vld [vmem:[#allocation7 + $0x30] sm:$0xf]
    %v303 = vld [vmem:[#allocation7 + $0x34] sm:$0xf]
    %v304 = vld [vmem:[#allocation7 + $0x38] sm:$0xf]
    %v305 = vld [vmem:[#allocation7 + $0x3c] sm:$0xf]
    %v306 = vld [vmem:[#allocation7 + $0x40] sm:$0xf]
    %v307 = vld [vmem:[#allocation7 + $0x44] sm:$0xf]
    %v308 = vld [vmem:[#allocation7 + $0x48] sm:$0xf]
    %v309 = vld [vmem:[#allocation7 + $0x4c] sm:$0xf]
    %v310 = vld [vmem:[#allocation7 + $0x50] sm:$0xf]
    %v311 = vld [vmem:[#allocation7 + $0x54] sm:$0xf]
    %v312 = vld [vmem:[#allocation7 + $0x58] sm:$0xf]
    %v313 = vld [vmem:[#allocation7 + $0x5c] sm:$0xf]
    %v314 = vld [vmem:[#allocation7 + $0x60] sm:$0xf]
    %v315 = vld [vmem:[#allocation7 + $0x64] sm:$0xf]
    %v316 = vld [vmem:[#allocation7 + $0x68] sm:$0xf]
    %v317 = vld [vmem:[#allocation7 + $0x6c] sm:$0xf]
    %v318 = vld [vmem:[#allocation7 + $0x70] sm:$0xf]
    %v319 = vld [vmem:[#allocation7 + $0x74] sm:$0xf]
    %v320 = vld [vmem:[#allocation7 + $0x78] sm:$0xf]
    %v321 = vld [vmem:[#allocation7 + $0x7c] sm:$0xf]
    %v322 = vld [vmem:[#allocation7 + $0x80] sm:$0xf]
    %v323 = vld [vmem:[#allocation7 + $0x84] sm:$0xf]
    %v324 = vld [vmem:[#allocation7 + $0x88] sm:$0xf]
    %v325 = vld [vmem:[#allocation7 + $0x8c] sm:$0xf]
    %v326 = vld [vmem:[#allocation7 + $0x90] sm:$0xf]
    %v327 = vld [vmem:[#allocation7 + $0x94] sm:$0xf]
    %v328 = vld [vmem:[#allocation7 + $0x98] sm:$0xf]
    %v329 = vld [vmem:[#allocation7 + $0x9c] sm:$0xf]
    %v330 = vld [vmem:[#allocation7 + $0xa0] sm:$0xf]
    %v331 = vld [vmem:[#allocation7 + $0xa4] sm:$0xf]
    %v332 = vld [vmem:[#allocation7 + $0xa8] sm:$0xf]
    %v333 = vld [vmem:[#allocation7 + $0xac] sm:$0xf]
    %v334 = vld [vmem:[#allocation7 + $0xb0] sm:$0xf]
    %v335 = vld [vmem:[#allocation7 + $0xb4] sm:$0xf]
    %v336 = vld [vmem:[#allocation7 + $0xb8] sm:$0xf]
    %v337 = vld [vmem:[#allocation7 + $0xbc] sm:$0xf]
    %v338 = vld [vmem:[#allocation7 + $0xc0] sm:$0xf]
    %v339 = vld [vmem:[#allocation7 + $0xc4] sm:$0xf]
    %v340 = vld [vmem:[#allocation7 + $0xc8] sm:$0xf]
    %v341 = vld [vmem:[#allocation7 + $0xcc] sm:$0xf]
    %v342 = vld [vmem:[#allocation7 + $0xd0] sm:$0xf]
    %v343 = vld [vmem:[#allocation7 + $0xd4] sm:$0xf]
    %v344 = vld [vmem:[#allocation7 + $0xd8] sm:$0xf]
    %v345 = vld [vmem:[#allocation7 + $0xdc] sm:$0xf]
    %v346 = vld [vmem:[#allocation7 + $0xe0] sm:$0xf]
    %v347 = vld [vmem:[#allocation7 + $0xe4] sm:$0xf]
    %v348 = vld [vmem:[#allocation7 + $0xe8] sm:$0xf]
    %v349 = vld [vmem:[#allocation7 + $0xec] sm:$0xf]
    %v350 = vld [vmem:[#allocation7 + $0xf0] sm:$0xf]
    %v351 = vld [vmem:[#allocation7 + $0xf4] sm:$0xf]
    %v352 = vld [vmem:[#allocation7 + $0xf8] sm:$0xf]
    %v353 = vld [vmem:[#allocation7 + $0xfc] sm:$0xf]
    %v354 = vld [vmem:[%s4] sm:$0x1]
    %v356 = vlaneseq
    %v357 = vshrl.u32 %v356, 7
    %v358 = vsub.s32 0, %v357
    %v359 = vrot.slane %v354, %v358
    %v425 = vunpack.c.l.b16 %v290
    %v426 = vunpack.c.l.b16 %v291
    %v427 = vunpack.c.l.b16 %v292
    %v428 = vunpack.c.l.b16 %v293
    %v429 = vunpack.c.l.b16 %v294
    %v430 = vunpack.c.l.b16 %v295
    %v431 = vunpack.c.l.b16 %v296
    %v432 = vunpack.c.l.b16 %v297
    %v433 = vunpack.c.l.b16 %v298
    %v434 = vunpack.c.l.b16 %v299
    %v435 = vunpack.c.l.b16 %v300
    %v436 = vunpack.c.l.b16 %v301
    %v437 = vunpack.c.l.b16 %v302
    %v438 = vunpack.c.l.b16 %v303
    %v439 = vunpack.c.l.b16 %v304
    %v440 = vunpack.c.l.b16 %v305
    %v441 = vunpack.c.l.b16 %v306
    %v442 = vunpack.c.l.b16 %v307
    %v443 = vunpack.c.l.b16 %v308
    %v444 = vunpack.c.l.b16 %v309
    %v445 = vunpack.c.l.b16 %v310
    %v446 = vunpack.c.l.b16 %v311
    %v447 = vunpack.c.l.b16 %v312
    %v448 = vunpack.c.l.b16 %v313
    %v449 = vunpack.c.l.b16 %v314
    %v450 = vunpack.c.l.b16 %v315
    %v451 = vunpack.c.l.b16 %v316
    %v452 = vunpack.c.l.b16 %v317
    %v453 = vunpack.c.l.b16 %v318
    %v454 = vunpack.c.l.b16 %v319
    %v455 = vunpack.c.l.b16 %v320
    %v456 = vunpack.c.l.b16 %v321
    %v457 = vunpack.c.l.b16 %v322
    %v458 = vunpack.c.l.b16 %v323
    %v459 = vunpack.c.l.b16 %v324
    %v460 = vunpack.c.l.b16 %v325
    %v461 = vunpack.c.l.b16 %v326
    %v462 = vunpack.c.l.b16 %v327
    %v463 = vunpack.c.l.b16 %v328
    %v464 = vunpack.c.l.b16 %v329
    %v465 = vunpack.c.l.b16 %v330
    %v466 = vunpack.c.l.b16 %v331
    %v467 = vunpack.c.l.b16 %v332
    %v468 = vunpack.c.l.b16 %v333
    %v469 = vunpack.c.l.b16 %v334
    %v470 = vunpack.c.l.b16 %v335
    %v471 = vunpack.c.l.b16 %v336
    %v472 = vunpack.c.l.b16 %v337
    %v473 = vunpack.c.l.b16 %v338
    %v474 = vunpack.c.l.b16 %v339
    %v475 = vunpack.c.l.b16 %v340
    %v476 = vunpack.c.l.b16 %v341
    %v477 = vunpack.c.l.b16 %v342
    %v478 = vunpack.c.l.b16 %v343
    %v479 = vunpack.c.l.b16 %v344
    %v480 = vunpack.c.l.b16 %v345
    %v481 = vunpack.c.l.b16 %v346
    %v482 = vunpack.c.l.b16 %v347
    %v483 = vunpack.c.l.b16 %v348
    %v484 = vunpack.c.l.b16 %v349
    %v485 = vunpack.c.l.b16 %v350
    %v486 = vunpack.c.l.b16 %v351
    %v487 = vunpack.c.l.b16 %v352
    %v488 = vunpack.c.l.b16 %v353
    %v489 = vpack.c.b16 %v426, %v425
    %v490 = vpack.c.b16 %v428, %v427
    %v491 = vpack.c.b16 %v430, %v429
    %v492 = vpack.c.b16 %v432, %v431
    %v493 = vpack.c.b16 %v434, %v433
    %v494 = vpack.c.b16 %v436, %v435
    %v495 = vpack.c.b16 %v438, %v437
    %v496 = vpack.c.b16 %v440, %v439
    %v497 = vpack.c.b16 %v442, %v441
    %v498 = vpack.c.b16 %v444, %v443
    %v499 = vpack.c.b16 %v446, %v445
    %v500 = vpack.c.b16 %v448, %v447
    %v501 = vpack.c.b16 %v450, %v449
    %v502 = vpack.c.b16 %v452, %v451
    %v503 = vpack.c.b16 %v454, %v453
    %v504 = vpack.c.b16 %v456, %v455
    %v505 = vpack.c.b16 %v458, %v457
    %v506 = vpack.c.b16 %v460, %v459
    %v507 = vpack.c.b16 %v462, %v461
    %v508 = vpack.c.b16 %v464, %v463
    %v509 = vpack.c.b16 %v466, %v465
    %v510 = vpack.c.b16 %v468, %v467
    %v511 = vpack.c.b16 %v470, %v469
    %v512 = vpack.c.b16 %v472, %v471
    %v513 = vpack.c.b16 %v474, %v473
    %v514 = vpack.c.b16 %v476, %v475
    %v515 = vpack.c.b16 %v478, %v477
    %v516 = vpack.c.b16 %v480, %v479
    %v517 = vpack.c.b16 %v482, %v481
    %v518 = vpack.c.b16 %v484, %v483
    %v519 = vpack.c.b16 %v486, %v485
    %v520 = vpack.c.b16 %v488, %v487
    %553 = vmatprep.subr.bf16.mxu0 0
    %554 = vmatpush1.bf16.msra.mxu0 %v489
    %555 = vmatprep.subr.bf16.mxu0 0
    %556 = vmatpush1.bf16.msra.mxu0 %v490
    %557 = vmatprep.subr.bf16.mxu0 0
    %558 = vmatpush1.bf16.msra.mxu0 %v491
    %559 = vmatprep.subr.bf16.mxu0 0
    %560 = vmatpush1.bf16.msra.mxu0 %v492
    %561 = vmatprep.subr.bf16.mxu0 0
    %562 = vmatpush1.bf16.msra.mxu0 %v493
    %563 = vmatprep.subr.bf16.mxu0 0
    %564 = vmatpush1.bf16.msra.mxu0 %v494
    %565 = vmatprep.subr.bf16.mxu0 0
    %566 = vmatpush1.bf16.msra.mxu0 %v495
    %567 = vmatprep.subr.bf16.mxu0 0
    %568 = vmatpush1.bf16.msra.mxu0 %v496
    %569 = vmatprep.subr.bf16.mxu0 0
    %570 = vmatpush1.bf16.msra.mxu0 %v497
    %571 = vmatprep.subr.bf16.mxu0 0
    %572 = vmatpush1.bf16.msra.mxu0 %v498
    %573 = vmatprep.subr.bf16.mxu0 0
    %574 = vmatpush1.bf16.msra.mxu0 %v499
    %575 = vmatprep.subr.bf16.mxu0 0
    %576 = vmatpush1.bf16.msra.mxu0 %v500
    %577 = vmatprep.subr.bf16.mxu0 0
    %578 = vmatpush1.bf16.msra.mxu0 %v501
    %579 = vmatprep.subr.bf16.mxu0 0
    %580 = vmatpush1.bf16.msra.mxu0 %v502
    %581 = vmatprep.subr.bf16.mxu0 0
    %582 = vmatpush1.bf16.msra.mxu0 %v503
    %583 = vmatprep.subr.bf16.mxu0 0
    %584 = vmatpush1.bf16.msra.mxu0 %v504
    %585 = vmatprep.mubr.bf16.mxu0 %v287
    %586 = vmatmul.mubr.bf16.gmra.mrb[0].mxu0 %v286
    %v587 = vpop.f32.mrb[0].mxu0
    %v588 = vadd.f32 %v359, %v587
    %v589 = vpop.f32.mrb[0].mxu0
    %v590 = vpop.f32.mrb[0].mxu0
    %v591 = vadd.f32 %v359, %v590
    %v592 = vpop.f32.mrb[0].mxu0
    %593 = vdwg.mxu0
    %594 = vmatprep.subr.bf16.mxu0 0
    %595 = vmatpush1.bf16.msra.mxu0 %v505
    %596 = vmatprep.subr.bf16.mxu0 0
    %597 = vmatpush1.bf16.msra.mxu0 %v506
    %598 = vmatprep.subr.bf16.mxu0 0
    %599 = vmatpush1.bf16.msra.mxu0 %v507
    %600 = vmatprep.subr.bf16.mxu0 0
    %601 = vmatpush1.bf16.msra.mxu0 %v508
    %602 = vmatprep.subr.bf16.mxu0 0
    %603 = vmatpush1.bf16.msra.mxu0 %v509
    %604 = vmatprep.subr.bf16.mxu0 0
    %605 = vmatpush1.bf16.msra.mxu0 %v510
    %606 = vmatprep.subr.bf16.mxu0 0
    %607 = vmatpush1.bf16.msra.mxu0 %v511
    %608 = vmatprep.subr.bf16.mxu0 0
    %609 = vmatpush1.bf16.msra.mxu0 %v512
    %610 = vmatprep.subr.bf16.mxu0 0
    %611 = vmatpush1.bf16.msra.mxu0 %v513
    %612 = vmatprep.subr.bf16.mxu0 0
    %613 = vmatpush1.bf16.msra.mxu0 %v514
    %614 = vmatprep.subr.bf16.mxu0 0
    %615 = vmatpush1.bf16.msra.mxu0 %v515
    %616 = vmatprep.subr.bf16.mxu0 0
    %617 = vmatpush1.bf16.msra.mxu0 %v516
    %618 = vmatprep.subr.bf16.mxu0 0
    %619 = vmatpush1.bf16.msra.mxu0 %v517
    %620 = vmatprep.subr.bf16.mxu0 0
    %621 = vmatpush1.bf16.msra.mxu0 %v518
    %622 = vmatprep.subr.bf16.mxu0 0
    %623 = vmatpush1.bf16.msra.mxu0 %v519
    %624 = vmatprep.subr.bf16.mxu0 0
    %625 = vmatpush1.bf16.msra.mxu0 %v520
    %626 = vmatprep.mubr.bf16.mxu0 %v289
    %627 = vmatmul.mubr.bf16.gmra.mrb[0].mxu0 %v288
    %v628 = vpop.f32.mrb[0].mxu0
    %v629 = vadd.f32 %v588, %v628
    %v630 = vpop.f32.mrb[0].mxu0
    %v631 = vpop.f32.mrb[0].mxu0
    %v632 = vadd.f32 %v591, %v631
    %v633 = vpop.f32.mrb[0].mxu0
    %634 = vdwg.mxu0
    %635 = vst [vmem:[#allocation8] sm:$0xff] %v629
    %636 = vst [vmem:[#allocation8 + $0x8] sm:$0xff] %v632
    // Predicated region
    $region34: #{tpu_custom_call.1} parent=1 // pred_check
      _
    $region35: #{tpu_custom_call.1} parent=1 // pred_check_branch
      %638 = sbr.rel (0) target = $region37
    $region36: #{tpu_custom_call.1} parent=1 // pred_region
      %s640 = ssub.s32 256, 256
      %641 = vsyncadd [#allocation4], %s640
      %s642 = sshll.u32 [#allocation8], 4
      %s643 = int_to_ptr.vmem [resolvable:$true] %s642
      %648 = dma.vmem_to_hbm [thread:$0]  %s643, 256, %s5, [#allocation4], 128, 128, 8
    $region37: #{tpu_custom_call.1} parent=1 // pred_fallthru
      _
    // Predicated region
    $region38: #{tpu_custom_call.1} parent=1 // pred_check
      _
    $region39: #{tpu_custom_call.1} parent=1 // pred_check_branch
      %650 = sbr.rel (0) target = $region41
    $region40: #{tpu_custom_call.1} parent=1 // pred_region
      %651 = dma.done [#allocation4], 256
    $region41: #{tpu_custom_call.1} parent=1 // pred_fallthru
      _
    %652 = vsyncpa [#allocation3], 1
    %653 = vsyncpa [#allocation6], 1
    %654 = vsyncpa [#allocation4], 1

</llo_original>
